<compile_context>
chip_gen: v7x
topology: tpu7x:2x2x1
jax: 0.10.0
libtpu: 0.0.40
codegen_flags: <defaults>
</compile_context>

<pallas_src>
import jax
import jax.numpy as jnp
from jax import lax
from jax.experimental import pallas as pl
from jax.experimental.pallas import tpu as pltpu


_VPU_MAX_UNROLL = 64          # use scalar-broadcast VPU kernel when qdim*udim <= this
_DEFAULT_TILE_N = 128 * 1024  # max batch columns per grid step (lane dim, mult. of 128)


def _round_up(x, m):
    return ((x + m - 1) // m) * m


def _vmem_capacity_bytes():
    try:
        info = pltpu.get_tpu_info()
        for attr in ("vmem_capacity_bytes", "vmem_size_bytes", "vmem_bytes"):
            val = getattr(info, attr, None)
            if val:
                return int(val)
    except Exception:
        pass
    return 64 << 20  # conservative: v7x per-TC physical VMEM


# ----------------------------- kernels --------------------------------------

def _caf_vpu_kernel(b_ref, ut_ref, o_ref):
    # Tiny-dim path.  b_ref: SMEM (qdim, udim); ut_ref: VMEM (udim, tile_n);
    # o_ref: VMEM (qdim, tile_n).  Every B[i, j] is a scalar (SMEM) broadcast,
    # so the unrolled multiply-add is pure VALU work (no XLU lane broadcast)
    # and all loads/stores are lane-dense along the batch axis.
    qdim, udim = b_ref.shape
    rows = [ut_ref[pl.ds(j, 1), :].astype(jnp.float32) for j in range(udim)]
    for i in range(qdim):                              # static unroll (qdim small)
        acc = b_ref[i, 0].astype(jnp.float32) * rows[0]
        for j in range(1, udim):                       # static unroll (udim small)
            acc = acc + b_ref[i, j].astype(jnp.float32) * rows[j]
        o_ref[pl.ds(i, 1), :] = acc.astype(o_ref.dtype)


def _caf_mxu_kernel(b_ref, ut_ref, o_ref):
    # Larger-dim path: F^T tile = B @ u^T tile on the MXU, f32 accumulation.
    # Operands stay in their input dtype (e.g. bf16 in), only output is cast.
    o_ref[...] = lax.dot_general(
        b_ref[...], ut_ref[...],
        dimension_numbers=(((1,), (0,)), ((), ())),
        preferred_element_type=jnp.float32,
    ).astype(o_ref.dtype)


# ----------------------------- wrapper ---------------------------------------

class ControlAffineLinearForce:
    """JAX/Pallas port of structmechmod.models.ControlAffineLinearForce."""

    def __init__(self, B, diag_embed=False, tile_n=_DEFAULT_TILE_N):
        self._B = jnp.asarray(B)
        self._diag_embed = diag_embed
        # Batch tile sits on the 128-lane minor axis -> round up to 128.
        self._tile_n = max(128, _round_up(int(tile_n), 128))
        self._dim_semantics = None  # resolved on first successful pallas_call
        if not diag_embed:
            assert self._B.ndim == 2, self._B.shape
            # f32 copy for the SMEM operand of the tiny-dim kernel (SMEM holds
            # 32-bit words; keeps the scalar path uniform across generations).
            self._B_f32 = self._B.astype(jnp.float32)

    # ---- helpers ------------------------------------------------------------

    def _semantics_options(self):
        opts = []
        if self._dim_semantics is not None:
            opts.append(self._dim_semantics)
        else:
            core_parallel = getattr(pltpu, "CORE_PARALLEL", None)
            if core_parallel is not None:
                # Shards the batch grid across both TensorCores on v7x.
                opts.append((core_parallel,))
        if ("parallel",) not in opts:
            opts.append(("parallel",))      # safe fallback, identical math
        return tuple(opts)

    def _pick_tile_and_vmem(self, N, udim, qdim, in_itemsize, out_itemsize,
                            b_vmem_bytes):
        # (8,128)-padding-aware VMEM accounting for the double-buffered tiles.
        rows_in = _round_up(udim, 8)
        rows_out = _round_up(qdim, 8)
        bytes_per_col = rows_in * in_itemsize + rows_out * out_itemsize
        vmem_cap = _vmem_capacity_bytes()
        # ~28 MiB working-set cap on 64 MiB-VMEM parts (v7x); 48 MiB otherwise.
        hard_cap = (28 << 20) if vmem_cap <= (64 << 20) else (48 << 20)
        budget = hard_cap - (4 << 20) - b_vmem_bytes    # headroom for scratch
        tile_n = min(self._tile_n, max(128, budget // (2 * bytes_per_col)))
        tile_n = max(128, (tile_n // 128) * 128)
        if N <= tile_n:
            tile_n = N          # full-extent block (always legal), single step
        grid = (pl.cdiv(N, tile_n),)
        pad_cols = _round_up(tile_n, 128)
        tile_bytes = 2 * bytes_per_col * pad_cols + b_vmem_bytes  # 2x = dbl-buffer
        vmem_limit = int(min(max(tile_bytes + (4 << 20), 8 << 20), hard_cap))
        return tile_n, grid, vmem_limit

    # ---- forward -------------------------------------------------------------

    def __call__(self, q, v, u):
        N = q.shape[0]
        assert u.shape[0] == N
        qdim = q.shape[1]
        udim = u.shape[1]

        if self._diag_embed:
            # Single broadcast-multiply: XLA already emits/fuses this optimally;
            # a Pallas wrapper would only add launch + DMA boundary overhead.
            F = (self._B * u)[:, :, None]
            assert F.shape == (N, qdim, 1), F.shape
            return F

        assert self._B.shape == (qdim, udim), self._B.shape
        out_dtype = jnp.result_type(self._B.dtype, u.dtype)
        out_itemsize = jnp.dtype(out_dtype).itemsize
        in_itemsize = jnp.dtype(u.dtype).itemsize

        use_vpu = (qdim * udim) <= _VPU_MAX_UNROLL

        # Lane-dense layout: batch on the 128-lane minor axis.
        ut = jnp.transpose(u)                            # (udim, N)

        if use_vpu:
            b_arg = self._B_f32                          # -> SMEM (scalar broadcasts)
            b_spec = pl.BlockSpec(memory_space=pltpu.MemorySpace.SMEM)
            kernel = _caf_vpu_kernel
            b_vmem_bytes = 0
        else:
            b_arg = self._B                              # -> resident VMEM block
            b_spec = pl.BlockSpec((qdim, udim), lambda i: (0, 0))
            kernel = _caf_mxu_kernel
            b_vmem_bytes = (_round_up(qdim, 8) * _round_up(udim, 128)
                            * jnp.dtype(self._B.dtype).itemsize)

        tile_n, grid, vmem_limit = self._pick_tile_and_vmem(
            N, udim, qdim, in_itemsize, out_itemsize, b_vmem_bytes)

        cost = pl.CostEstimate(
            flops=2 * N * qdim * udim,
            transcendentals=0,
            bytes_accessed=(u.size * in_itemsize
                            + self._B.size * jnp.dtype(self._B.dtype).itemsize
                            + N * qdim * out_itemsize),
        )

        def _build(dim_semantics):
            return pl.pallas_call(
                kernel,
                out_shape=jax.ShapeDtypeStruct((qdim, N), out_dtype),
                grid=grid,
                in_specs=[
                    b_spec,
                    pl.BlockSpec((udim, tile_n), lambda i: (0, i)),  # u^T tile
                ],
                out_specs=pl.BlockSpec((qdim, tile_n), lambda i: (0, i)),
                compiler_params=pltpu.CompilerParams(
                    dimension_semantics=dim_semantics,
                    vmem_limit_bytes=vmem_limit,
                ),
                cost_estimate=cost,
            )

        first_resolution = self._dim_semantics is None
        f_t = None
        last_err = None
        for sem in self._semantics_options():
            try:
                f_t = _build(sem)(b_arg, ut)
                if first_resolution:
                    f_t = jax.block_until_ready(f_t)  # surface any rejection here
                self._dim_semantics = sem
                break
            except Exception as e:  # e.g. CORE_PARALLEL unsupported -> fall back
                last_err = e
                f_t = None
        if f_t is None:
            raise last_err

        F = jnp.transpose(f_t)[:, :, None]               # (N, qdim, 1)
        assert F.shape == (N, qdim, 1), F.shape
        return F


# ----------------------------- demo / check ----------------------------------

if __name__ == "__main__":
    key = jax.random.PRNGKey(0)
    k_b, k_q, k_v, k_u, k_bd, k_b2, k_u2, k_u3 = jax.random.split(key, 8)

    # ---- case 1: non-diag, tiny dims (VPU/SMEM path), N=2 ----
    N, qdim, udim = 2, 4, 3
    B = jax.random.normal(k_b, (qdim, udim), dtype=jnp.float32)
    q = jax.random.normal(k_q, (N, qdim), dtype=jnp.float32)
    v = jax.random.normal(k_v, (N, qdim), dtype=jnp.float32)
    u = jax.random.normal(k_u, (N, udim), dtype=jnp.float32)

    mod = ControlAffineLinearForce(B, diag_embed=False)
    F = jax.block_until_ready(mod(q, v, u))
    F_ref = B[None, :, :] @ u[:, :, None]
    assert F.shape == (N, qdim, 1)
    assert jnp.allclose(F, F_ref, atol=1e-5, rtol=1e-5)

    # ---- case 2: non-diag, multi-tile grid with a partial final lane block ----
    N2 = 300
    q2 = jax.random.normal(k_q, (N2, qdim), dtype=jnp.float32)
    v2 = jax.random.normal(k_v, (N2, qdim), dtype=jnp.float32)
    u2 = jax.random.normal(k_u2, (N2, udim), dtype=jnp.float32)
    mod2 = ControlAffineLinearForce(B, diag_embed=False, tile_n=128)  # grid=(3,)
    F2 = jax.block_until_ready(mod2(q2, v2, u2))
    F2_ref = B[None, :, :] @ u2[:, :, None]
    assert F2.shape == (N2, qdim, 1)
    assert jnp.allclose(F2, F2_ref, atol=1e-5, rtol=1e-5)

    # ---- case 3: non-diag, larger dims (MXU path) ----
    N3, qdim3, udim3 = 64, 48, 40
    B3 = jax.random.normal(k_b2, (qdim3, udim3), dtype=jnp.float32)
    q3 = jax.random.normal(k_q, (N3, qdim3), dtype=jnp.float32)
    v3 = jax.random.normal(k_v, (N3, qdim3), dtype=jnp.float32)
    u3 = jax.random.normal(k_u3, (N3, udim3), dtype=jnp.float32)
    mod3 = ControlAffineLinearForce(B3, diag_embed=False)
    F3 = jax.block_until_ready(mod3(q3, v3, u3))
    F3_ref = B3[None, :, :] @ u3[:, :, None]
    assert F3.shape == (N3, qdim3, 1)
    assert jnp.allclose(F3, F3_ref, atol=1e-4, rtol=1e-4)

    # ---- case 4: diag branch (qdim == udim), plain-JAX broadcast ----
    Bd = jax.random.normal(k_bd, (qdim,), dtype=jnp.float32)
    ud = jax.random.normal(k_u, (N, qdim), dtype=jnp.float32)
    mod_d = ControlAffineLinearForce(Bd, diag_embed=True)
    Fd = jax.block_until_ready(mod_d(q, v, ud))
    Fd_ref = (Bd[None, :] * ud)[:, :, None]
    assert Fd.shape == (N, qdim, 1)
    assert jnp.allclose(Fd, Fd_ref, atol=1e-5, rtol=1e-5)

    print("KERNEL_OK")
</pallas_src>

<mosaic_0001>
module attributes {stable_mosaic.version = 11 : i64} {
  func.func @_caf_vpu_kernel(%arg0: i32, %arg1: memref<4x3xf32, #tpu.memory_space<smem>>, %arg2: memref<3x2xf32, #tpu.memory_space<vmem>>, %arg3: memref<4x2xf32, #tpu.memory_space<vmem>>) attributes {dimension_semantics = [#tpu.dimension_semantics<core_parallel>], iteration_bounds = array<i64: 1>, scalar_prefetch = 0 : i64, scratch_operands = 0 : i64, tpu.core_type = #tpu.core_type<tc>, window_params = [{transform_indices = @transform_0, window_bounds = array<i64: 4, 3>}, {transform_indices = @transform_1, window_bounds = array<i64: 3, 2>}, {transform_indices = @transform_2, window_bounds = array<i64: 4, 2>}]} {
    %c0 = arith.constant 0 : index
    %c0_0 = arith.constant 0 : index
    %0 = vector.load %arg2[%c0, %c0_0] : memref<3x2xf32, #tpu.memory_space<vmem>>, vector<1x2xf32>
    %c1 = arith.constant 1 : index
    %c0_1 = arith.constant 0 : index
    %1 = vector.load %arg2[%c1, %c0_1] : memref<3x2xf32, #tpu.memory_space<vmem>>, vector<1x2xf32>
    %c2 = arith.constant 2 : index
    %c0_2 = arith.constant 0 : index
    %2 = vector.load %arg2[%c2, %c0_2] : memref<3x2xf32, #tpu.memory_space<vmem>>, vector<1x2xf32>
    %c0_3 = arith.constant 0 : index
    %c0_4 = arith.constant 0 : index
    %3 = memref.load %arg1[%c0_3, %c0_4] : memref<4x3xf32, #tpu.memory_space<smem>>
    %4 = vector.broadcast %3 : f32 to vector<1x2xf32>
    %5 = arith.mulf %4, %0 : vector<1x2xf32>
    %c0_5 = arith.constant 0 : index
    %c1_6 = arith.constant 1 : index
    %6 = memref.load %arg1[%c0_5, %c1_6] : memref<4x3xf32, #tpu.memory_space<smem>>
    %7 = vector.broadcast %6 : f32 to vector<1x2xf32>
    %8 = arith.mulf %7, %1 : vector<1x2xf32>
    %9 = arith.addf %5, %8 : vector<1x2xf32>
    %c0_7 = arith.constant 0 : index
    %c2_8 = arith.constant 2 : index
    %10 = memref.load %arg1[%c0_7, %c2_8] : memref<4x3xf32, #tpu.memory_space<smem>>
    %11 = vector.broadcast %10 : f32 to vector<1x2xf32>
    %12 = arith.mulf %11, %2 : vector<1x2xf32>
    %13 = arith.addf %9, %12 : vector<1x2xf32>
    %c0_9 = arith.constant 0 : index
    %c0_10 = arith.constant 0 : index
    %14 = vector.load %arg3[%c0_9, %c0_10] : memref<4x2xf32, #tpu.memory_space<vmem>>, vector<1x2xf32>
    tpu.vector_store %arg3[%c0_9, %c0_10], %13 {strides = array<i32>} : memref<4x2xf32, #tpu.memory_space<vmem>>, vector<1x2xf32>,
    %c1_11 = arith.constant 1 : index
    %c0_12 = arith.constant 0 : index
    %15 = memref.load %arg1[%c1_11, %c0_12] : memref<4x3xf32, #tpu.memory_space<smem>>
    %16 = vector.broadcast %15 : f32 to vector<1x2xf32>
    %17 = arith.mulf %16, %0 : vector<1x2xf32>
    %c1_13 = arith.constant 1 : index
    %c1_14 = arith.constant 1 : index
    %18 = memref.load %arg1[%c1_13, %c1_14] : memref<4x3xf32, #tpu.memory_space<smem>>
    %19 = vector.broadcast %18 : f32 to vector<1x2xf32>
    %20 = arith.mulf %19, %1 : vector<1x2xf32>
    %21 = arith.addf %17, %20 : vector<1x2xf32>
    %c1_15 = arith.constant 1 : index
    %c2_16 = arith.constant 2 : index
    %22 = memref.load %arg1[%c1_15, %c2_16] : memref<4x3xf32, #tpu.memory_space<smem>>
    %23 = vector.broadcast %22 : f32 to vector<1x2xf32>
    %24 = arith.mulf %23, %2 : vector<1x2xf32>
    %25 = arith.addf %21, %24 : vector<1x2xf32>
    %c1_17 = arith.constant 1 : index
    %c0_18 = arith.constant 0 : index
    %26 = vector.load %arg3[%c1_17, %c0_18] : memref<4x2xf32, #tpu.memory_space<vmem>>, vector<1x2xf32>
    tpu.vector_store %arg3[%c1_17, %c0_18], %25 {strides = array<i32>} : memref<4x2xf32, #tpu.memory_space<vmem>>, vector<1x2xf32>,
    %c2_19 = arith.constant 2 : index
    %c0_20 = arith.constant 0 : index
    %27 = memref.load %arg1[%c2_19, %c0_20] : memref<4x3xf32, #tpu.memory_space<smem>>
    %28 = vector.broadcast %27 : f32 to vector<1x2xf32>
    %29 = arith.mulf %28, %0 : vector<1x2xf32>
    %c2_21 = arith.constant 2 : index
    %c1_22 = arith.constant 1 : index
    %30 = memref.load %arg1[%c2_21, %c1_22] : memref<4x3xf32, #tpu.memory_space<smem>>
    %31 = vector.broadcast %30 : f32 to vector<1x2xf32>
    %32 = arith.mulf %31, %1 : vector<1x2xf32>
    %33 = arith.addf %29, %32 : vector<1x2xf32>
    %c2_23 = arith.constant 2 : index
    %c2_24 = arith.constant 2 : index
    %34 = memref.load %arg1[%c2_23, %c2_24] : memref<4x3xf32, #tpu.memory_space<smem>>
    %35 = vector.broadcast %34 : f32 to vector<1x2xf32>
    %36 = arith.mulf %35, %2 : vector<1x2xf32>
    %37 = arith.addf %33, %36 : vector<1x2xf32>
    %c2_25 = arith.constant 2 : index
    %c0_26 = arith.constant 0 : index
    %38 = vector.load %arg3[%c2_25, %c0_26] : memref<4x2xf32, #tpu.memory_space<vmem>>, vector<1x2xf32>
    tpu.vector_store %arg3[%c2_25, %c0_26], %37 {strides = array<i32>} : memref<4x2xf32, #tpu.memory_space<vmem>>, vector<1x2xf32>,
    %c3 = arith.constant 3 : index
    %c0_27 = arith.constant 0 : index
    %39 = memref.load %arg1[%c3, %c0_27] : memref<4x3xf32, #tpu.memory_space<smem>>
    %40 = vector.broadcast %39 : f32 to vector<1x2xf32>
    %41 = arith.mulf %40, %0 : vector<1x2xf32>
    %c3_28 = arith.constant 3 : index
    %c1_29 = arith.constant 1 : index
    %42 = memref.load %arg1[%c3_28, %c1_29] : memref<4x3xf32, #tpu.memory_space<smem>>
    %43 = vector.broadcast %42 : f32 to vector<1x2xf32>
    %44 = arith.mulf %43, %1 : vector<1x2xf32>
    %45 = arith.addf %41, %44 : vector<1x2xf32>
    %c3_30 = arith.constant 3 : index
    %c2_31 = arith.constant 2 : index
    %46 = memref.load %arg1[%c3_30, %c2_31] : memref<4x3xf32, #tpu.memory_space<smem>>
    %47 = vector.broadcast %46 : f32 to vector<1x2xf32>
    %48 = arith.mulf %47, %2 : vector<1x2xf32>
    %49 = arith.addf %45, %48 : vector<1x2xf32>
    %c3_32 = arith.constant 3 : index
    %c0_33 = arith.constant 0 : index
    %50 = vector.load %arg3[%c3_32, %c0_33] : memref<4x2xf32, #tpu.memory_space<vmem>>, vector<1x2xf32>
    tpu.vector_store %arg3[%c3_32, %c0_33], %49 {strides = array<i32>} : memref<4x2xf32, #tpu.memory_space<vmem>>, vector<1x2xf32>,
    return
  }
  func.func @transform_0(%arg0: i32) -> (i32, i32) {
    %c0_i32 = arith.constant 0 : i32
    %c0_i32_0 = arith.constant 0 : i32
    %c0_i32_1 = arith.constant 0 : i32
    return %c0_i32, %c0_i32_0 : i32, i32
  }
  func.func @transform_1(%arg0: i32) -> (i32, i32) {
    %c0_i32 = arith.constant 0 : i32
    %c0_i32_0 = arith.constant 0 : i32
    return %c0_i32, %arg0 : i32, i32
  }
  func.func @transform_2(%arg0: i32) -> (i32, i32) {
    %c0_i32 = arith.constant 0 : i32
    %c0_i32_0 = arith.constant 0 : i32
    return %c0_i32, %arg0 : i32, i32
  }
}

module attributes {stable_mosaic.version = 11 : i64} {
  func.func @_caf_vpu_kernel(%arg0: i32, %arg1: memref<4x3xf32, #tpu.memory_space<smem>>, %arg2: memref<3x2xf32, #tpu.memory_space<vmem>>, %arg3: memref<4x2xf32, #tpu.memory_space<vmem>>) attributes {dimension_semantics = [#tpu.dimension_semantics<parallel>], iteration_bounds = array<i64: 1>, scalar_prefetch = 0 : i64, scratch_operands = 0 : i64, tpu.core_type = #tpu.core_type<tc>, window_params = [{transform_indices = @transform_0, window_bounds = array<i64: 4, 3>}, {transform_indices = @transform_1, window_bounds = array<i64: 3, 2>}, {transform_indices = @transform_2, window_bounds = array<i64: 4, 2>}]} {
    %c0 = arith.constant 0 : index
    %c0_0 = arith.constant 0 : index
    %0 = vector.load %arg2[%c0, %c0_0] : memref<3x2xf32, #tpu.memory_space<vmem>>, vector<1x2xf32>
    %c1 = arith.constant 1 : index
    %c0_1 = arith.constant 0 : index
    %1 = vector.load %arg2[%c1, %c0_1] : memref<3x2xf32, #tpu.memory_space<vmem>>, vector<1x2xf32>
    %c2 = arith.constant 2 : index
    %c0_2 = arith.constant 0 : index
    %2 = vector.load %arg2[%c2, %c0_2] : memref<3x2xf32, #tpu.memory_space<vmem>>, vector<1x2xf32>
    %c0_3 = arith.constant 0 : index
    %c0_4 = arith.constant 0 : index
    %3 = memref.load %arg1[%c0_3, %c0_4] : memref<4x3xf32, #tpu.memory_space<smem>>
    %4 = vector.broadcast %3 : f32 to vector<1x2xf32>
    %5 = arith.mulf %4, %0 : vector<1x2xf32>
    %c0_5 = arith.constant 0 : index
    %c1_6 = arith.constant 1 : index
    %6 = memref.load %arg1[%c0_5, %c1_6] : memref<4x3xf32, #tpu.memory_space<smem>>
    %7 = vector.broadcast %6 : f32 to vector<1x2xf32>
    %8 = arith.mulf %7, %1 : vector<1x2xf32>
    %9 = arith.addf %5, %8 : vector<1x2xf32>
    %c0_7 = arith.constant 0 : index
    %c2_8 = arith.constant 2 : index
    %10 = memref.load %arg1[%c0_7, %c2_8] : memref<4x3xf32, #tpu.memory_space<smem>>
    %11 = vector.broadcast %10 : f32 to vector<1x2xf32>
    %12 = arith.mulf %11, %2 : vector<1x2xf32>
    %13 = arith.addf %9, %12 : vector<1x2xf32>
    %c0_9 = arith.constant 0 : index
    %c0_10 = arith.constant 0 : index
    %14 = vector.load %arg3[%c0_9, %c0_10] : memref<4x2xf32, #tpu.memory_space<vmem>>, vector<1x2xf32>
    tpu.vector_store %arg3[%c0_9, %c0_10], %13 {strides = array<i32>} : memref<4x2xf32, #tpu.memory_space<vmem>>, vector<1x2xf32>,
    %c1_11 = arith.constant 1 : index
    %c0_12 = arith.constant 0 : index
    %15 = memref.load %arg1[%c1_11, %c0_12] : memref<4x3xf32, #tpu.memory_space<smem>>
    %16 = vector.broadcast %15 : f32 to vector<1x2xf32>
    %17 = arith.mulf %16, %0 : vector<1x2xf32>
    %c1_13 = arith.constant 1 : index
    %c1_14 = arith.constant 1 : index
    %18 = memref.load %arg1[%c1_13, %c1_14] : memref<4x3xf32, #tpu.memory_space<smem>>
    %19 = vector.broadcast %18 : f32 to vector<1x2xf32>
    %20 = arith.mulf %19, %1 : vector<1x2xf32>
    %21 = arith.addf %17, %20 : vector<1x2xf32>
    %c1_15 = arith.constant 1 : index
    %c2_16 = arith.constant 2 : index
    %22 = memref.load %arg1[%c1_15, %c2_16] : memref<4x3xf32, #tpu.memory_space<smem>>
    %23 = vector.broadcast %22 : f32 to vector<1x2xf32>
    %24 = arith.mulf %23, %2 : vector<1x2xf32>
    %25 = arith.addf %21, %24 : vector<1x2xf32>
    %c1_17 = arith.constant 1 : index
    %c0_18 = arith.constant 0 : index
    %26 = vector.load %arg3[%c1_17, %c0_18] : memref<4x2xf32, #tpu.memory_space<vmem>>, vector<1x2xf32>
    tpu.vector_store %arg3[%c1_17, %c0_18], %25 {strides = array<i32>} : memref<4x2xf32, #tpu.memory_space<vmem>>, vector<1x2xf32>,
    %c2_19 = arith.constant 2 : index
    %c0_20 = arith.constant 0 : index
    %27 = memref.load %arg1[%c2_19, %c0_20] : memref<4x3xf32, #tpu.memory_space<smem>>
    %28 = vector.broadcast %27 : f32 to vector<1x2xf32>
    %29 = arith.mulf %28, %0 : vector<1x2xf32>
    %c2_21 = arith.constant 2 : index
    %c1_22 = arith.constant 1 : index
    %30 = memref.load %arg1[%c2_21, %c1_22] : memref<4x3xf32, #tpu.memory_space<smem>>
    %31 = vector.broadcast %30 : f32 to vector<1x2xf32>
    %32 = arith.mulf %31, %1 : vector<1x2xf32>
    %33 = arith.addf %29, %32 : vector<1x2xf32>
    %c2_23 = arith.constant 2 : index
    %c2_24 = arith.constant 2 : index
    %34 = memref.load %arg1[%c2_23, %c2_24] : memref<4x3xf32, #tpu.memory_space<smem>>
    %35 = vector.broadcast %34 : f32 to vector<1x2xf32>
    %36 = arith.mulf %35, %2 : vector<1x2xf32>
    %37 = arith.addf %33, %36 : vector<1x2xf32>
    %c2_25 = arith.constant 2 : index
    %c0_26 = arith.constant 0 : index
    %38 = vector.load %arg3[%c2_25, %c0_26] : memref<4x2xf32, #tpu.memory_space<vmem>>, vector<1x2xf32>
    tpu.vector_store %arg3[%c2_25, %c0_26], %37 {strides = array<i32>} : memref<4x2xf32, #tpu.memory_space<vmem>>, vector<1x2xf32>,
    %c3 = arith.constant 3 : index
    %c0_27 = arith.constant 0 : index
    %39 = memref.load %arg1[%c3, %c0_27] : memref<4x3xf32, #tpu.memory_space<smem>>
    %40 = vector.broadcast %39 : f32 to vector<1x2xf32>
    %41 = arith.mulf %40, %0 : vector<1x2xf32>
    %c3_28 = arith.constant 3 : index
    %c1_29 = arith.constant 1 : index
    %42 = memref.load %arg1[%c3_28, %c1_29] : memref<4x3xf32, #tpu.memory_space<smem>>
    %43 = vector.broadcast %42 : f32 to vector<1x2xf32>
    %44 = arith.mulf %43, %1 : vector<1x2xf32>
    %45 = arith.addf %41, %44 : vector<1x2xf32>
    %c3_30 = arith.constant 3 : index
    %c2_31 = arith.constant 2 : index
    %46 = memref.load %arg1[%c3_30, %c2_31] : memref<4x3xf32, #tpu.memory_space<smem>>
    %47 = vector.broadcast %46 : f32 to vector<1x2xf32>
    %48 = arith.mulf %47, %2 : vector<1x2xf32>
    %49 = arith.addf %45, %48 : vector<1x2xf32>
    %c3_32 = arith.constant 3 : index
    %c0_33 = arith.constant 0 : index
    %50 = vector.load %arg3[%c3_32, %c0_33] : memref<4x2xf32, #tpu.memory_space<vmem>>, vector<1x2xf32>
    tpu.vector_store %arg3[%c3_32, %c0_33], %49 {strides = array<i32>} : memref<4x2xf32, #tpu.memory_space<vmem>>, vector<1x2xf32>,
    return
  }
  func.func @transform_0(%arg0: i32) -> (i32, i32) {
    %c0_i32 = arith.constant 0 : i32
    %c0_i32_0 = arith.constant 0 : i32
    %c0_i32_1 = arith.constant 0 : i32
    return %c0_i32, %c0_i32_0 : i32, i32
  }
  func.func @transform_1(%arg0: i32) -> (i32, i32) {
    %c0_i32 = arith.constant 0 : i32
    %c0_i32_0 = arith.constant 0 : i32
    return %c0_i32, %arg0 : i32, i32
  }
  func.func @transform_2(%arg0: i32) -> (i32, i32) {
    %c0_i32 = arith.constant 0 : i32
    %c0_i32_0 = arith.constant 0 : i32
    return %c0_i32, %arg0 : i32, i32
  }
}

</mosaic_0001>

<llo_original>
// kernel: tpu_custom_call.1
$region0: #{tpu_custom_call.1}
  #allocation0 [shape = 'u32[]', space=smem, size = 0x4, offset = 0x4, fixed_abs, tag = 'smem constant byte address 0x4 - core index']
  #allocation1 [shape = 'u32[144,128]{1,0:T(1,128)}', space=vmem, size = 0x12000, scoped, tag = 'internal scratch']
  %s0 = inlined_call_operand.vmem [shape: f32[4,3], index: 0, kind: input, shape index: {}]
  %s1 = inlined_call_operand.vmem [shape: f32[3,2], index: 1, kind: input, shape index: {}]
  %s2 = inlined_call_operand.vmem [shape: f32[4,2], index: 2, kind: output, shape index: {}]
  %s3 = sld [smem:[#allocation0]]
  $region22: #{tpu_custom_call.1} parent=0
    _
  %s5 = ssub.s32 1, %s3
  %s6 = scalar_select 0, %s5, %s3
  $region1: #{tpu_custom_call.1} parent=0
    #allocation2 [shape = 'u8[2048]{0}', space=smem, size = 0x800, scoped, tag = 'input window, operand 0, single buffered']
    #allocation3 [shape = 's32[1]{0}', space=sflag, size = 0x4, scoped, tag = 'scoped memory for tpu_custom_call.1']
    %7 = vsyncpa [#allocation3], 0
    // Predicated region
    $region2: #{tpu_custom_call.1} parent=1 // pred_check
      _
    $region3: #{tpu_custom_call.1} parent=1 // pred_check_branch
      %9 = sbr.rel (0) target = $region5
    $region4: #{tpu_custom_call.1} parent=1 // pred_region
      %s11 = ssub.s32 64, 64
      %12 = vsyncadd [#allocation3], %s11
      %s14 = sshll.u32 %s0, 4
      %s15 = int_to_ptr.vmem [resolvable:$true] %s14
      %17 = dma.vmem_to_smem %s15, 64, [#allocation2], [#allocation3]
    $region5: #{tpu_custom_call.1} parent=1 // pred_fallthru
      _
    // Predicated region
    $region6: #{tpu_custom_call.1} parent=1 // pred_check
      _
    $region7: #{tpu_custom_call.1} parent=1 // pred_check_branch
      %19 = sbr.rel (0) target = $region9
    $region8: #{tpu_custom_call.1} parent=1 // pred_region
      %p20 = scmp.lt.s32.totalorder %s6, 0
      %s21 = scalar_select %p20, %s6, 0
      %s22 = smul.addr %s21, 4
      %s23 = scalar_lea.vmem %s1, %s22
    $region9: #{tpu_custom_call.1} parent=1 // pred_fallthru
      _
    // Predicated region
    $region10: #{tpu_custom_call.1} parent=1 // pred_check
      _
    $region11: #{tpu_custom_call.1} parent=1 // pred_check_branch
      %25 = sbr.rel (0) target = $region13
    $region12: #{tpu_custom_call.1} parent=1 // pred_region
      %26 = dma.done [#allocation3], 64
    $region13: #{tpu_custom_call.1} parent=1 // pred_fallthru
      _
    %27 = sfence
    %p28 = scmp.lt.s32.totalorder %s6, 0
    %s29 = scalar_select %p28, %s6, 0
    %s30 = smul.addr %s29, 4
    %s31 = scalar_lea.vmem %s1, %s30
    %p32 = scmp.lt.s32.totalorder %s6, 0
    %s33 = scalar_select %p32, %s6, 0
    %s34 = smul.addr %s33, 4
    %s35 = scalar_lea.vmem %s2, %s34
    %p36 = scmp.lt.s32.totalorder %s6, 0
    %s37 = scalar_select %p36, %s6, 0
    %s38 = smul.addr %s37, 4
    %s39 = scalar_lea.vmem %s1, %s38
    %p40 = scmp.lt.s32.totalorder %s6, 0
    %s41 = scalar_select %p40, %s6, 0
    %s42 = smul.addr %s41, 4
    %s43 = scalar_lea.vmem %s2, %s42
    %v44 = vld [vmem:[%s39] sm:$0x1]
    %v45 = vld [vmem:[%s39 + $0x1] sm:$0x1]
    %v46 = vld [vmem:[%s39 + $0x2] sm:$0x1]
    %s47 = sld [smem:[#allocation2]]
    %v48 = vstv %s47
    %v49 = vmul.f32 %v48, %v44
    %s50 = sld [smem:[#allocation2 + $0x1]]
    %v51 = vstv %s50
    %v52 = vmul.f32 %v51, %v45
    %v53 = vadd.f32 %v49, %v52
    %s54 = sld [smem:[#allocation2 + $0x2]]
    %v55 = vstv %s54
    %v56 = vmul.f32 %v55, %v46
    %v57 = vadd.f32 %v53, %v56
    %vm58 = vcmask 8192
    %59 = vst.msk [vmem:[%s43] sm:$0x1] %vm58, %v57
    %s60 = sld [smem:[#allocation2 + $0x80]]
    %v61 = vstv %s60
    %v62 = vmul.f32 %v61, %v44
    %s63 = sld [smem:[#allocation2 + $0x81]]
    %v64 = vstv %s63
    %v65 = vmul.f32 %v64, %v45
    %v66 = vadd.f32 %v62, %v65
    %s67 = sld [smem:[#allocation2 + $0x82]]
    %v68 = vstv %s67
    %v69 = vmul.f32 %v68, %v46
    %v70 = vadd.f32 %v66, %v69
    %71 = vst.msk [vmem:[%s43 + $0x1] sm:$0x1] %vm58, %v70
    %s72 = sld [smem:[#allocation2 + $0x100]]
    %v73 = vstv %s72
    %v74 = vmul.f32 %v73, %v44
    %s75 = sld [smem:[#allocation2 + $0x101]]
    %v76 = vstv %s75
    %v77 = vmul.f32 %v76, %v45
    %v78 = vadd.f32 %v74, %v77
    %s79 = sld [smem:[#allocation2 + $0x102]]
    %v80 = vstv %s79
    %v81 = vmul.f32 %v80, %v46
    %v82 = vadd.f32 %v78, %v81
    %83 = vst.msk [vmem:[%s43 + $0x2] sm:$0x1] %vm58, %v82
    %s84 = sld [smem:[#allocation2 + $0x180]]
    %v85 = vstv %s84
    %v86 = vmul.f32 %v85, %v44
    %s87 = sld [smem:[#allocation2 + $0x181]]
    %v88 = vstv %s87
    %v89 = vmul.f32 %v88, %v45
    %v90 = vadd.f32 %v86, %v89
    %s91 = sld [smem:[#allocation2 + $0x182]]
    %v92 = vstv %s91
    %v93 = vmul.f32 %v92, %v46
    %v94 = vadd.f32 %v90, %v93
    %95 = vst.msk [vmem:[%s43 + $0x3] sm:$0x1] %vm58, %v94
    %p96 = scmp.lt.s32.totalorder %s6, 0
    %s97 = scalar_select %p96, %s6, 0
    %s98 = smul.addr %s97, 4
    %s99 = scalar_lea.vmem %s2, %s98
    // Predicated region
    $region14: #{tpu_custom_call.1} parent=1 // pred_check
      _
    $region15: #{tpu_custom_call.1} parent=1 // pred_check_branch
      %101 = sbr.rel (0) target = $region17
    $region16: #{tpu_custom_call.1} parent=1 // pred_region
      _
    $region17: #{tpu_custom_call.1} parent=1 // pred_fallthru
      _
    // Predicated region
    $region18: #{tpu_custom_call.1} parent=1 // pred_check
      _
    $region19: #{tpu_custom_call.1} parent=1 // pred_check_branch
      %103 = sbr.rel (0) target = $region21
    $region20: #{tpu_custom_call.1} parent=1 // pred_region
      %p104 = scmp.lt.s32.totalorder %s6, 0
      %s105 = scalar_select %p104, %s6, 0
      %s106 = smul.addr %s105, 4
      %s107 = scalar_lea.vmem %s2, %s106
    $region21: #{tpu_custom_call.1} parent=1 // pred_fallthru
      _
    %108 = vsyncpa [#allocation3], 1

// kernel: tpu_custom_call.1
$region0: #{tpu_custom_call.1}
  #allocation0 [shape = 'u32[]', space=smem, size = 0x4, offset = 0x4, fixed_abs, tag = 'smem constant byte address 0x4 - core index']
  #allocation1 [shape = 'u32[144,128]{1,0:T(1,128)}', space=vmem, size = 0x12000, scoped, tag = 'internal scratch']
  %s0 = inlined_call_operand.vmem [shape: f32[4,3], index: 0, kind: input, shape index: {}]
  %s1 = inlined_call_operand.vmem [shape: f32[3,2], index: 1, kind: input, shape index: {}]
  %s2 = inlined_call_operand.vmem [shape: f32[4,2], index: 2, kind: output, shape index: {}]
  %s3 = sld [smem:[#allocation0]]
  $region22: #{tpu_custom_call.1} parent=0
    _
  %s5 = ssub.s32 1, %s3
  %s6 = scalar_select 0, %s5, %s3
  $region1: #{tpu_custom_call.1} parent=0
    #allocation2 [shape = 'u8[2048]{0}', space=smem, size = 0x800, scoped, tag = 'input window, operand 0, single buffered']
    #allocation3 [shape = 's32[1]{0}', space=sflag, size = 0x4, scoped, tag = 'scoped memory for tpu_custom_call.1']
    %7 = vsyncpa [#allocation3], 0
    // Predicated region
    $region2: #{tpu_custom_call.1} parent=1 // pred_check
      _
    $region3: #{tpu_custom_call.1} parent=1 // pred_check_branch
      %9 = sbr.rel (0) target = $region5
    $region4: #{tpu_custom_call.1} parent=1 // pred_region
      %s11 = ssub.s32 64, 64
      %12 = vsyncadd [#allocation3], %s11
      %s14 = sshll.u32 %s0, 4
      %s15 = int_to_ptr.vmem [resolvable:$true] %s14
      %17 = dma.vmem_to_smem %s15, 64, [#allocation2], [#allocation3]
    $region5: #{tpu_custom_call.1} parent=1 // pred_fallthru
      _
    // Predicated region
    $region6: #{tpu_custom_call.1} parent=1 // pred_check
      _
    $region7: #{tpu_custom_call.1} parent=1 // pred_check_branch
      %19 = sbr.rel (0) target = $region9
    $region8: #{tpu_custom_call.1} parent=1 // pred_region
      _
    $region9: #{tpu_custom_call.1} parent=1 // pred_fallthru
      _
    // Predicated region
    $region10: #{tpu_custom_call.1} parent=1 // pred_check
      _
    $region11: #{tpu_custom_call.1} parent=1 // pred_check_branch
      %21 = sbr.rel (0) target = $region13
    $region12: #{tpu_custom_call.1} parent=1 // pred_region
      %22 = dma.done [#allocation3], 64
    $region13: #{tpu_custom_call.1} parent=1 // pred_fallthru
      _
    %23 = sfence
    %v24 = vld [vmem:[%s1] sm:$0x1]
    %v25 = vld [vmem:[%s1 + $0x1] sm:$0x1]
    %v26 = vld [vmem:[%s1 + $0x2] sm:$0x1]
    %s27 = sld [smem:[#allocation2]]
    %v28 = vstv %s27
    %v29 = vmul.f32 %v28, %v24
    %s30 = sld [smem:[#allocation2 + $0x1]]
    %v31 = vstv %s30
    %v32 = vmul.f32 %v31, %v25
    %v33 = vadd.f32 %v29, %v32
    %s34 = sld [smem:[#allocation2 + $0x2]]
    %v35 = vstv %s34
    %v36 = vmul.f32 %v35, %v26
    %v37 = vadd.f32 %v33, %v36
    %vm38 = vcmask 8192
    %39 = vst.msk [vmem:[%s2] sm:$0x1] %vm38, %v37
    %s40 = sld [smem:[#allocation2 + $0x80]]
    %v41 = vstv %s40
    %v42 = vmul.f32 %v41, %v24
    %s43 = sld [smem:[#allocation2 + $0x81]]
    %v44 = vstv %s43
    %v45 = vmul.f32 %v44, %v25
    %v46 = vadd.f32 %v42, %v45
    %s47 = sld [smem:[#allocation2 + $0x82]]
    %v48 = vstv %s47
    %v49 = vmul.f32 %v48, %v26
    %v50 = vadd.f32 %v46, %v49
    %51 = vst.msk [vmem:[%s2 + $0x1] sm:$0x1] %vm38, %v50
    %s52 = sld [smem:[#allocation2 + $0x100]]
    %v53 = vstv %s52
    %v54 = vmul.f32 %v53, %v24
    %s55 = sld [smem:[#allocation2 + $0x101]]
    %v56 = vstv %s55
    %v57 = vmul.f32 %v56, %v25
    %v58 = vadd.f32 %v54, %v57
    %s59 = sld [smem:[#allocation2 + $0x102]]
    %v60 = vstv %s59
    %v61 = vmul.f32 %v60, %v26
    %v62 = vadd.f32 %v58, %v61
    %63 = vst.msk [vmem:[%s2 + $0x2] sm:$0x1] %vm38, %v62
    %s64 = sld [smem:[#allocation2 + $0x180]]
    %v65 = vstv %s64
    %v66 = vmul.f32 %v65, %v24
    %s67 = sld [smem:[#allocation2 + $0x181]]
    %v68 = vstv %s67
    %v69 = vmul.f32 %v68, %v25
    %v70 = vadd.f32 %v66, %v69
    %s71 = sld [smem:[#allocation2 + $0x182]]
    %v72 = vstv %s71
    %v73 = vmul.f32 %v72, %v26
    %v74 = vadd.f32 %v70, %v73
    %75 = vst.msk [vmem:[%s2 + $0x3] sm:$0x1] %vm38, %v74
    // Predicated region
    $region14: #{tpu_custom_call.1} parent=1 // pred_check
      _
    $region15: #{tpu_custom_call.1} parent=1 // pred_check_branch
      %77 = sbr.rel (0) target = $region17
    $region16: #{tpu_custom_call.1} parent=1 // pred_region
      _
    $region17: #{tpu_custom_call.1} parent=1 // pred_fallthru
      _
    // Predicated region
    $region18: #{tpu_custom_call.1} parent=1 // pred_check
      _
    $region19: #{tpu_custom_call.1} parent=1 // pred_check_branch
      %79 = sbr.rel (0) target = $region21
    $region20: #{tpu_custom_call.1} parent=1 // pred_region
      _
    $region21: #{tpu_custom_call.1} parent=1 // pred_fallthru
      _
    %80 = vsyncpa [#allocation3], 1

</llo_original>
